<compile_context>
chip_gen: v6e
topology: v6e:2x2x1
jax: 0.10.0
libtpu: 0.0.40
codegen_flags: <defaults>
</compile_context>

<pallas_src>
import re

import jax
import jax.numpy as jnp
from jax.experimental import pallas as pl
from jax.experimental.pallas import tpu as pltpu


def _pos_enc_kernel(x_ref, pe_ref, o_ref):
    # position == arange(seq_len), so pe[position] == pe[:seq_len]; the
    # BlockSpec index_map for `pe` selects exactly the same row window as x.
    o_ref[...] = (x_ref[...] + pe_ref[...]).astype(o_ref.dtype)


def _tpu_generation():
    """Best-effort TPU generation (5, 6, 7, ...).  Falls back to 6."""
    try:
        kind = jax.devices()[0].device_kind  # e.g. "TPU v5 lite", "TPU v6e"
        m = re.search(r"v(\d+)", kind)
        if m:
            return int(m.group(1))
    except Exception:
        pass
    return 6


def _vmem_capacity_bytes(gen):
    """Per-core VMEM capacity; queries hardware, falls back per generation."""
    try:
        info = pltpu.get_tpu_info()
        cap = getattr(info, "vmem_capacity_bytes", None)
        if cap:
            return int(cap)
    except Exception:
        pass
    return (64 if gen >= 7 else 128) * 1024 * 1024


def _round_up(n, m):
    return -(-n // m) * m


def _choose_tiles(S, D, x_dtype):
    """Pick (tile_s, tile_d, vmem_limit) sized for the current TPU generation.

    Per-step bytes = 2 (double buffer) x (x + pe + out) blocks must fit the
    tile budget, which is derived from the same VMEM number as
    vmem_limit_bytes so the two stay consistent (v7x only has 64 MiB/TC).
    """
    gen = _tpu_generation()
    capacity = _vmem_capacity_bytes(gen)
    vmem_limit = int(capacity * 0.75)          # headroom for Mosaic scratch
    tile_budget = int(vmem_limit * 0.6)        # headroom under the limit

    itemsize = jnp.dtype(x_dtype).itemsize     # pe is cast to x.dtype upstream

    # Sublane packing: 8 rows (f32), 16 (bf16), 32 (int8/fp8).
    pack = max(8, 32 // itemsize)

    # Feature tiling: prefer full-D (contiguous rows, lane-dense stores);
    # fall back to 2048-wide (multiple-of-128) chunks only for very wide D
    # where full-D would squeeze rows below ~256.
    def rows_for(td):
        bytes_per_row = 2 * td * 3 * itemsize
        return max(pack, tile_budget // bytes_per_row)

    tile_d = D
    if D > 4096 and D % 128 == 0 and rows_for(D) < 256:
        tile_d = 2048
    max_rows = rows_for(tile_d)

    # Generation-aware row cap: overhead-amortization needs more rows as
    # HBM gets faster (v7x), but there is no point beyond the budget.
    s_cap = {5: 512, 6: 1024}.get(gen, 2048)
    tile_s = min(s_cap, max_rows)
    tile_s = max(pack, (tile_s // pack) * pack)

    # Never taller than the (pack-rounded) sequence itself.
    s_ceil = _round_up(S, pack)
    tile_s = min(tile_s, s_ceil)

    # v7x: make sure the 'parallel' S axis has >= 2 blocks so both
    # TensorCores stream data (otherwise one TC idles on moderate S).
    if gen >= 7 and s_ceil >= 2 * pack and tile_s >= s_ceil:
        tile_s = max(pack, _round_up((S + 1) // 2, pack))

    return tile_s, tile_d, vmem_limit


def learnable_positional_encoding(x, pe, *, tile_s=None, tile_d=None):
    """out = x + pe[:x.shape[0]] implemented as a Pallas TPU kernel.

    x : (S, D)        input activations
    pe: (max_len, D)  learnable positional table (max_len >= S)
    The output dtype follows x.dtype (pe is cast to x.dtype to halve its
    HBM traffic in the mixed-precision case).
    """
    S, D = x.shape
    max_len, Dp = pe.shape
    assert Dp == D and max_len >= S

    # Reduce HBM bytes on this bandwidth-bound op: stream pe at x's dtype.
    if pe.dtype != x.dtype:
        pe = pe.astype(x.dtype)

    ts, td, vmem_limit = _choose_tiles(S, D, x.dtype)
    if tile_s is not None:
        ts = tile_s
    if tile_d is not None:
        td = tile_d

    grid = (pl.cdiv(S, ts), pl.cdiv(D, td))

    return pl.pallas_call(
        _pos_enc_kernel,
        out_shape=jax.ShapeDtypeStruct((S, D), x.dtype),
        grid=grid,
        in_specs=[
            # x tile (i, j) -> rows [i*ts, (i+1)*ts), cols [j*td, (j+1)*td)
            pl.BlockSpec((ts, td), lambda i, j: (i, j)),
            # pe tile (i, j) -> same rows (position = arange(S) gather)
            pl.BlockSpec((ts, td), lambda i, j: (i, j)),
        ],
        out_specs=pl.BlockSpec((ts, td), lambda i, j: (i, j)),
        compiler_params=pltpu.CompilerParams(
            dimension_semantics=("parallel", "parallel"),
            vmem_limit_bytes=vmem_limit,
        ),
    )(x, pe)


if __name__ == "__main__":
    d_model = 512
    key = jax.random.PRNGKey(0)
    kx, kpe, kx2, kx3 = jax.random.split(key, 4)

    # Small example consistent with the module's forward: x (seq_len, d_model),
    # pe (max_len, d_model), pe init ~ N(0, 0.02).
    seq_len, max_len = 16, 64
    x = jax.random.normal(kx, (seq_len, d_model), dtype=jnp.float32)
    pe = 0.02 * jax.random.normal(kpe, (max_len, d_model), dtype=jnp.float32)

    out = jax.block_until_ready(learnable_positional_encoding(x, pe))
    ref = x + pe[jnp.arange(seq_len)]
    assert out.shape == ref.shape and out.dtype == ref.dtype
    assert jnp.allclose(out, ref, atol=1e-6), "mismatch vs reference (small)"

    # Non-divisible seq_len exercises the cdiv / masked last-block path.
    seq_len2, max_len2 = 1000, 1024
    x2 = jax.random.normal(kx2, (seq_len2, d_model), dtype=jnp.float32)
    pe2 = 0.02 * jax.random.normal(kpe, (max_len2, d_model), dtype=jnp.float32)
    out2 = jax.block_until_ready(learnable_positional_encoding(x2, pe2))
    ref2 = x2 + pe2[jnp.arange(seq_len2)]
    assert jnp.allclose(out2, ref2, atol=1e-6), "mismatch vs reference (ragged)"

    # Mixed-precision path: bf16 activations, f32 parameter (pe is cast to
    # bf16 in the wrapper; reference mirrors that cast).
    x3 = jax.random.normal(kx3, (seq_len, d_model), dtype=jnp.bfloat16)
    out3 = jax.block_until_ready(learnable_positional_encoding(x3, pe))
    ref3 = x3 + pe[jnp.arange(seq_len)].astype(jnp.bfloat16)
    assert out3.dtype == jnp.bfloat16
    assert jnp.allclose(out3.astype(jnp.float32), ref3.astype(jnp.float32),
                        atol=1e-2), "mismatch vs reference (bf16)"

    print("KERNEL_OK")
</pallas_src>

<mosaic_0001>
module attributes {stable_mosaic.version = 11 : i64} {
  func.func @_pos_enc_kernel(%arg0: i32, %arg1: i32, %arg2: memref<16x512xf32, #tpu.memory_space<vmem>>, %arg3: memref<16x512xf32, #tpu.memory_space<vmem>>, %arg4: memref<16x512xf32, #tpu.memory_space<vmem>>) attributes {dimension_semantics = [#tpu.dimension_semantics<parallel>, #tpu.dimension_semantics<parallel>], iteration_bounds = array<i64: 1, 1>, scalar_prefetch = 0 : i64, scratch_operands = 0 : i64, tpu.core_type = #tpu.core_type<tc>, window_params = [{transform_indices = @transform_0, window_bounds = array<i64: 16, 512>}, {transform_indices = @transform_1, window_bounds = array<i64: 16, 512>}, {transform_indices = @transform_2, window_bounds = array<i64: 16, 512>}]} {
    %c0 = arith.constant 0 : index
    %c0_0 = arith.constant 0 : index
    %0 = vector.load %arg2[%c0, %c0_0] : memref<16x512xf32, #tpu.memory_space<vmem>>, vector<16x512xf32>
    %c0_1 = arith.constant 0 : index
    %c0_2 = arith.constant 0 : index
    %1 = vector.load %arg3[%c0_1, %c0_2] : memref<16x512xf32, #tpu.memory_space<vmem>>, vector<16x512xf32>
    %2 = arith.addf %0, %1 : vector<16x512xf32>
    %c0_3 = arith.constant 0 : index
    %c0_4 = arith.constant 0 : index
    %3 = vector.load %arg4[%c0_3, %c0_4] : memref<16x512xf32, #tpu.memory_space<vmem>>, vector<16x512xf32>
    tpu.vector_store %arg4[%c0_3, %c0_4], %2 {strides = array<i32>} : memref<16x512xf32, #tpu.memory_space<vmem>>, vector<16x512xf32>,
    return
  }
  func.func @transform_0(%arg0: i32, %arg1: i32) -> (i32, i32) {
    %c0_i32 = arith.constant 0 : i32
    return %arg0, %arg1 : i32, i32
  }
  func.func @transform_1(%arg0: i32, %arg1: i32) -> (i32, i32) {
    %c0_i32 = arith.constant 0 : i32
    return %arg0, %arg1 : i32, i32
  }
  func.func @transform_2(%arg0: i32, %arg1: i32) -> (i32, i32) {
    %c0_i32 = arith.constant 0 : i32
    return %arg0, %arg1 : i32, i32
  }
}

</mosaic_0001>

<llo_original>
// kernel: tpu_custom_call.1
$region0: #{tpu_custom_call.1}
  #allocation0 [shape = 'u32[]', space=smem, size = 0x4, offset = 0x4, fixed_abs, tag = 'smem constant byte address 0x4 - core index']
  #allocation1 [shape = 'u32[144,128]{1,0:T(1,128)}', space=vmem, size = 0x12000, scoped, tag = 'internal scratch']
  %s0 = inlined_call_operand.hbm [shape: f32[16,512], index: 0, kind: input, shape index: {}]
  %s1 = inlined_call_operand.hbm [shape: f32[64,512], index: 1, kind: input, shape index: {}]
  %s2 = inlined_call_operand.hbm [shape: f32[16,512], index: 2, kind: output, shape index: {}]
  %s3 = sld [smem:[#allocation0]]
  $region26: #{tpu_custom_call.1} parent=0
    _
  %s5 = ssub.s32 1, %s3
  %s6 = scalar_select 0, %s5, %s3
  $region1: #{tpu_custom_call.1} parent=0
    #allocation2 [shape = 'u8[32768]{0}', space=vmem, size = 0x8000, scoped, tag = 'input window, operand 0, single buffered']
    #allocation3 [shape = 's32[1]{0}', space=sflag, size = 0x4, scoped, tag = 'scoped memory for tpu_custom_call.1']
    #allocation4 [shape = 's32[1]{0}', space=sflag, size = 0x4, scoped, tag = 'scoped memory for tpu_custom_call.1']
    #allocation5 [shape = 'u8[32768]{0}', space=vmem, size = 0x8000, scoped, tag = 'input window, operand 1, single buffered']
    #allocation6 [shape = 's32[1]{0}', space=sflag, size = 0x4, scoped, tag = 'scoped memory for tpu_custom_call.1']
    #allocation7 [shape = 'u8[32768]{0}', space=vmem, size = 0x8000, scoped, tag = 'output window, operand 0, single buffered']
    %7 = vsyncpa [#allocation3], 0
    %8 = vsyncpa [#allocation6], 0
    %9 = vsyncpa [#allocation4], 0
    // Predicated region
    $region2: #{tpu_custom_call.1} parent=1 // pred_check
      _
    $region3: #{tpu_custom_call.1} parent=1 // pred_check_branch
      %11 = sbr.rel (0) target = $region5
    $region4: #{tpu_custom_call.1} parent=1 // pred_region
      %s13 = ssub.s32 1024, 1024
      %14 = vsyncadd [#allocation3], %s13
      %s15 = sshll.u32 [#allocation2], 4
      %s16 = int_to_ptr.vmem [resolvable:$true] %s15
      %21 = dma.hbm_to_vmem [thread:$0]  %s0, 1024, %s16, [#allocation3], 512, 512, 32
    $region5: #{tpu_custom_call.1} parent=1 // pred_fallthru
      _
    // Predicated region
    $region6: #{tpu_custom_call.1} parent=1 // pred_check
      _
    $region7: #{tpu_custom_call.1} parent=1 // pred_check_branch
      %23 = sbr.rel (0) target = $region9
    $region8: #{tpu_custom_call.1} parent=1 // pred_region
      %s25 = ssub.s32 1024, 1024
      %26 = vsyncadd [#allocation6], %s25
      %s27 = sshll.u32 [#allocation5], 4
      %s28 = int_to_ptr.vmem [resolvable:$true] %s27
      %33 = dma.hbm_to_vmem [thread:$0]  %s1, 1024, %s28, [#allocation6], 512, 512, 32
    $region9: #{tpu_custom_call.1} parent=1 // pred_fallthru
      _
    // Predicated region
    $region10: #{tpu_custom_call.1} parent=1 // pred_check
      _
    $region11: #{tpu_custom_call.1} parent=1 // pred_check_branch
      %35 = sbr.rel (0) target = $region13
    $region12: #{tpu_custom_call.1} parent=1 // pred_region
      %36 = dma.done [#allocation3], 1024
    $region13: #{tpu_custom_call.1} parent=1 // pred_fallthru
      _
    // Predicated region
    $region14: #{tpu_custom_call.1} parent=1 // pred_check
      _
    $region15: #{tpu_custom_call.1} parent=1 // pred_check_branch
      %38 = sbr.rel (0) target = $region17
    $region16: #{tpu_custom_call.1} parent=1 // pred_region
      %39 = dma.done [#allocation6], 1024
    $region17: #{tpu_custom_call.1} parent=1 // pred_fallthru
      _
    %v40 = vld [vmem:[#allocation2] sm:$0xff]
    %v41 = vld [vmem:[#allocation2 + $0x8] sm:$0xff]
    %v42 = vld [vmem:[#allocation2 + $0x10] sm:$0xff]
    %v43 = vld [vmem:[#allocation2 + $0x18] sm:$0xff]
    %v44 = vld [vmem:[#allocation2 + $0x20] sm:$0xff]
    %v45 = vld [vmem:[#allocation2 + $0x28] sm:$0xff]
    %v46 = vld [vmem:[#allocation2 + $0x30] sm:$0xff]
    %v47 = vld [vmem:[#allocation2 + $0x38] sm:$0xff]
    %v48 = vld [vmem:[#allocation5] sm:$0xff]
    %v49 = vld [vmem:[#allocation5 + $0x8] sm:$0xff]
    %v50 = vld [vmem:[#allocation5 + $0x10] sm:$0xff]
    %v51 = vld [vmem:[#allocation5 + $0x18] sm:$0xff]
    %v52 = vld [vmem:[#allocation5 + $0x20] sm:$0xff]
    %v53 = vld [vmem:[#allocation5 + $0x28] sm:$0xff]
    %v54 = vld [vmem:[#allocation5 + $0x30] sm:$0xff]
    %v55 = vld [vmem:[#allocation5 + $0x38] sm:$0xff]
    %v56 = vadd.f32 %v40, %v48
    %v57 = vadd.f32 %v41, %v49
    %v58 = vadd.f32 %v42, %v50
    %v59 = vadd.f32 %v43, %v51
    %v60 = vadd.f32 %v44, %v52
    %v61 = vadd.f32 %v45, %v53
    %v62 = vadd.f32 %v46, %v54
    %v63 = vadd.f32 %v47, %v55
    %64 = vst [vmem:[#allocation7] sm:$0xff] %v56
    %65 = vst [vmem:[#allocation7 + $0x8] sm:$0xff] %v57
    %66 = vst [vmem:[#allocation7 + $0x10] sm:$0xff] %v58
    %67 = vst [vmem:[#allocation7 + $0x18] sm:$0xff] %v59
    %68 = vst [vmem:[#allocation7 + $0x20] sm:$0xff] %v60
    %69 = vst [vmem:[#allocation7 + $0x28] sm:$0xff] %v61
    %70 = vst [vmem:[#allocation7 + $0x30] sm:$0xff] %v62
    %71 = vst [vmem:[#allocation7 + $0x38] sm:$0xff] %v63
    // Predicated region
    $region18: #{tpu_custom_call.1} parent=1 // pred_check
      _
    $region19: #{tpu_custom_call.1} parent=1 // pred_check_branch
      %73 = sbr.rel (0) target = $region21
    $region20: #{tpu_custom_call.1} parent=1 // pred_region
      %s75 = ssub.s32 1024, 1024
      %76 = vsyncadd [#allocation4], %s75
      %s77 = sshll.u32 [#allocation7], 4
      %s78 = int_to_ptr.vmem [resolvable:$true] %s77
      %83 = dma.vmem_to_hbm [thread:$0]  %s78, 1024, %s2, [#allocation4], 512, 512, 32
    $region21: #{tpu_custom_call.1} parent=1 // pred_fallthru
      _
    // Predicated region
    $region22: #{tpu_custom_call.1} parent=1 // pred_check
      _
    $region23: #{tpu_custom_call.1} parent=1 // pred_check_branch
      %85 = sbr.rel (0) target = $region25
    $region24: #{tpu_custom_call.1} parent=1 // pred_region
      %86 = dma.done [#allocation4], 1024
    $region25: #{tpu_custom_call.1} parent=1 // pred_fallthru
      _
    %87 = vsyncpa [#allocation3], 1
    %88 = vsyncpa [#allocation6], 1
    %89 = vsyncpa [#allocation4], 1

</llo_original>
